<compile_context>
chip_gen: v7x
topology: tpu7x:2x2x1
jax: 0.10.0
libtpu: 0.0.40
codegen_flags: <defaults>
</compile_context>

<pallas_src>
import functools

import jax
import jax.numpy as jnp
from jax import lax
from jax.experimental import pallas as pl
from jax.experimental.pallas import tpu as pltpu


_SQRT1_2 = 0.7071067811865476          # 1/sqrt(2)
_SQRT_2_OVER_PI = 0.7978845608028654   # sqrt(2/pi)


def _gelu_f32(h, approximate):
    if approximate:
        # tanh-approx GELU: tanh lowers to the EUP slot and overlaps with the
        # MXU, avoiding the erf VALU polynomial (perf win on v6e/v7x bf16).
        return 0.5 * h * (1.0 + jnp.tanh(
            jnp.float32(_SQRT_2_OVER_PI) * (h + jnp.float32(0.044715) * h * h * h)))
    # exact (erf-based) GELU == PyTorch F.gelu default
    return 0.5 * h * (1.0 + lax.erf(h * jnp.float32(_SQRT1_2)))


# ----------------------------------------------------------------------------
# Kernels
# ----------------------------------------------------------------------------
def _ffn_kernel_f32out(x_ref, w1_ref, b1_ref, w2_ref, b2_ref, o_ref, *,
                       approximate):
    # f32 output: accumulate fc2 partial products directly into the resident
    # output block -> no extra VMEM scratch, no finalize copy.
    f = pl.program_id(1)

    h = jnp.dot(x_ref[...], w1_ref[...], preferred_element_type=jnp.float32)
    h = h + b1_ref[...].astype(jnp.float32)
    h = _gelu_f32(h, approximate)
    # activation dropout -> identity (eval mode)
    part = jnp.dot(h.astype(w2_ref.dtype), w2_ref[...],
                   preferred_element_type=jnp.float32)

    @pl.when(f == 0)
    def _first():
        o_ref[...] = part + b2_ref[...].astype(jnp.float32)

    @pl.when(f > 0)
    def _rest():
        o_ref[...] += part


def _ffn_kernel_acc(x_ref, w1_ref, b1_ref, w2_ref, b2_ref, o_ref, acc_ref, *,
                    approximate):
    # Non-f32 output (e.g. bf16): keep a resident f32 accumulator scratch.
    f = pl.program_id(1)
    nf = pl.num_programs(1)

    @pl.when(f == 0)
    def _init():
        acc_ref[...] = jnp.zeros_like(acc_ref)

    h = jnp.dot(x_ref[...], w1_ref[...], preferred_element_type=jnp.float32)
    h = h + b1_ref[...].astype(jnp.float32)
    h = _gelu_f32(h, approximate)
    # activation dropout -> identity (eval mode)
    acc_ref[...] += jnp.dot(h.astype(w2_ref.dtype), w2_ref[...],
                            preferred_element_type=jnp.float32)

    @pl.when(f == nf - 1)
    def _finalize():
        o_ref[...] = (acc_ref[...]
                      + b2_ref[...].astype(jnp.float32)).astype(o_ref.dtype)


# ----------------------------------------------------------------------------
# Planning helpers (static, runs in plain Python)
# ----------------------------------------------------------------------------
def _round_up(x, m):
    return ((x + m - 1) // m) * m


@functools.lru_cache(maxsize=1)
def _default_vmem_limit_bytes():
    """Generation-aware VMEM limit: ~100 MiB on 128-MiB parts, <=56 MiB on v7x."""
    cap = None
    try:
        cap = int(pltpu.get_tpu_info().vmem_capacity_bytes)
    except Exception:
        cap = None
    if cap is None:
        cap = 64 * 1024 * 1024          # conservative (v7x per-TC VMEM)
    if cap >= 96 * 1024 * 1024:         # v5e / v6e: 128 MiB physical
        return 100 * 1024 * 1024
    return min(56 * 1024 * 1024, int(0.875 * cap))


def _plan_tiles(M, E, F_dim, *, in_itemsize, w_itemsize, out_itemsize,
                block_m, block_f, vmem_limit_bytes, allow_resident, needs_acc):
    """Pick (tm, tf).  tf always divides F.  Shrinks tf before tm when over budget."""
    block_m = max(8, _round_up(block_m, 8))
    block_f = max(128, (block_f // 128) * 128)

    # Row tile from a ladder: split M into ceil(M/block_m) near-equal tiles so
    # short inputs aren't padded to a full block_m-row tile.
    n_m = -(-M // block_m)
    tm = min(_round_up(-(-M // n_m), 8), _round_up(M, 8))

    def vmem_est(tm_, tf_):
        # Conservative: assume double buffering for every BlockSpec operand.
        return (2 * tm_ * E * in_itemsize          # x tiles
                + 2 * E * tf_ * w_itemsize         # w1 chunk
                + 2 * tf_ * E * w_itemsize         # w2 chunk
                + 2 * tf_ * w_itemsize             # b1 chunk
                + 2 * E * w_itemsize               # b2
                + 2 * tm_ * E * out_itemsize       # out tiles
                + (tm_ * E * 4 if needs_acc else 0))

    budget = int(0.8 * vmem_limit_bytes)
    divs = [t for t in range(128, min(block_f, F_dim) + 1, 128) if F_dim % t == 0]

    if allow_resident and vmem_est(tm, F_dim) <= budget:
        tf = F_dim                      # weight-resident: weights DMA'd once
    elif divs:
        fitting = [t for t in divs if vmem_est(tm, t) <= budget]
        if fitting:
            tf = max(fitting)
        else:
            tf = min(divs)
            while vmem_est(tm, tf) > budget and tm > 64:
                tm = max(64, _round_up(tm // 2, 8))
    else:
        tf = F_dim                      # F not a multiple of 128: whole-F fallback
        while vmem_est(tm, tf) > budget and tm > 64:
            tm = max(64, _round_up(tm // 2, 8))

    return tm, tf


# ----------------------------------------------------------------------------
# pallas_call wrapper
# ----------------------------------------------------------------------------
@functools.partial(jax.jit,
                   static_argnames=("tm", "tf", "vmem_limit_bytes", "approximate"))
def _ffn_pallas(x, w1, b1, w2, b2, *, tm, tf, vmem_limit_bytes, approximate):
    B, S, E = x.shape
    F_dim = w1.shape[1]
    M = B * S
    x2d = x.reshape(M, E)

    M_pad = _round_up(M, tm)
    if M_pad != M:
        x2d = jnp.pad(x2d, ((0, M_pad - M), (0, 0)))

    n_m = M_pad // tm
    n_f = F_dim // tf
    grid = (n_m, n_f)

    out_dtype = x.dtype
    use_acc_scratch = out_dtype != jnp.float32

    # Weights are re-streamed once per M tile when F is chunked (weight block
    # index changes every step); a grid-invariant weight block (tf == F) is
    # fetched exactly once.
    itm = lambda a: a.size * a.dtype.itemsize
    w_reads = n_m if n_f > 1 else 1
    cost = pl.CostEstimate(
        flops=4 * M_pad * E * F_dim,                 # two matmuls
        transcendentals=M_pad * F_dim,               # erf/tanh on hidden acts
        bytes_accessed=(itm(x2d) + M_pad * E * jnp.dtype(out_dtype).itemsize
                        + w_reads * (itm(w1) + itm(w2) + itm(b1)) + itm(b2)),
    )

    if use_acc_scratch:
        kernel = functools.partial(_ffn_kernel_acc, approximate=approximate)
        scratch = [pltpu.VMEM((tm, E), jnp.float32)]
    else:
        kernel = functools.partial(_ffn_kernel_f32out, approximate=approximate)
        scratch = []

    out2d = pl.pallas_call(
        kernel,
        out_shape=jax.ShapeDtypeStruct((M_pad, E), out_dtype),
        grid_spec=pltpu.PrefetchScalarGridSpec(
            num_scalar_prefetch=0,
            grid=grid,
            in_specs=[
                pl.BlockSpec((tm, E), lambda i, f: (i, 0)),   # x rows
                pl.BlockSpec((E, tf), lambda i, f: (0, f)),   # w1 F-chunk
                pl.BlockSpec((1, tf), lambda i, f: (0, f)),   # b1 F-chunk
                pl.BlockSpec((tf, E), lambda i, f: (f, 0)),   # w2 F-chunk
                pl.BlockSpec((1, E), lambda i, f: (0, 0)),    # b2 (grid-invariant)
            ],
            out_specs=pl.BlockSpec((tm, E), lambda i, f: (i, 0)),
            scratch_shapes=scratch,
        ),
        compiler_params=pltpu.CompilerParams(
            dimension_semantics=("parallel", "arbitrary"),
            vmem_limit_bytes=vmem_limit_bytes,
        ),
        cost_estimate=cost,
    )(x2d, w1, b1.reshape(1, F_dim), w2, b2.reshape(1, E))

    return out2d[:M].reshape(B, S, E)


def positionwise_ffn(x, w1, b1, w2, b2, *,
                     block_m=1024, block_f=512,
                     weight_resident="auto",
                     approximate_gelu=False,
                     vmem_limit_bytes=None):
    """PositionwiseFeedForwardLayer forward (inference).

    x: (B, S, E).  w1: (E, F), b1: (F,), w2: (F, E), b2: (E,).
    Weights are stored pre-transposed (in_dim, out_dim) so the kernel does
    plain row-major x @ W matmuls on the MXU (f32 accumulation, native-dtype
    operands — feed bf16 weights/activations for full MXU rate on v6e/v7x).
    """
    B, S, E = x.shape
    F_dim = w1.shape[1]
    M = B * S

    if vmem_limit_bytes is None:
        vmem_limit_bytes = _default_vmem_limit_bytes()

    tm, tf = _plan_tiles(
        M, E, F_dim,
        in_itemsize=x.dtype.itemsize,
        w_itemsize=w1.dtype.itemsize,
        out_itemsize=x.dtype.itemsize,
        block_m=block_m, block_f=block_f,
        vmem_limit_bytes=vmem_limit_bytes,
        allow_resident=(weight_resident in ("auto", True)),
        needs_acc=(x.dtype != jnp.float32),
    )

    return _ffn_pallas(x, w1, b1, w2, b2, tm=tm, tf=tf,
                       vmem_limit_bytes=int(vmem_limit_bytes),
                       approximate=bool(approximate_gelu))


# ----------------------------------------------------------------------------
# Reference / test
# ----------------------------------------------------------------------------
def _init_linear(key, in_dim, out_dim, dtype=jnp.float32):
    # nn.Linear default init: U(-1/sqrt(in), 1/sqrt(in)) for weight and bias.
    kw, kb = jax.random.split(key)
    bound = 1.0 / jnp.sqrt(jnp.float32(in_dim))
    # Stored pre-transposed: (in_dim, out_dim) so kernel computes x @ W.
    w = jax.random.uniform(kw, (in_dim, out_dim), jnp.float32, -bound, bound)
    b = jax.random.uniform(kb, (out_dim,), jnp.float32, -bound, bound)
    return w.astype(dtype), b.astype(dtype)


def _reference_ffn(x, w1, b1, w2, b2):
    h = x.reshape(-1, x.shape[-1]).astype(jnp.float32) @ w1.astype(jnp.float32)
    h = h + b1.astype(jnp.float32)
    h = 0.5 * h * (1.0 + lax.erf(h / jnp.sqrt(jnp.float32(2.0))))
    out = h @ w2.astype(jnp.float32) + b2.astype(jnp.float32)
    return out.reshape(x.shape)


if __name__ == "__main__":
    key = jax.random.PRNGKey(0)

    # --- Case 1: spec-sized toy problem (embed_dim=32, ffn_dim=64) -----------
    embed_dim, ffn_dim = 32, 64
    batch, seq = 2, 8
    kx, k1, k2 = jax.random.split(key, 3)
    x = jax.random.normal(kx, (batch, seq, embed_dim), jnp.float32)
    w1, b1 = _init_linear(k1, embed_dim, ffn_dim)
    w2, b2 = _init_linear(k2, ffn_dim, embed_dim)

    out = positionwise_ffn(x, w1, b1, w2, b2)
    jax.block_until_ready(out)
    ref = _reference_ffn(x, w1, b1, w2, b2)
    assert jnp.allclose(out, ref, atol=1e-4, rtol=1e-4), "f32 mismatch vs reference"

    # bf16 weights/activations straight into the MXU (f32 accumulation),
    # tanh-approx GELU (EUP path).
    xb = x.astype(jnp.bfloat16)
    out_bf16 = positionwise_ffn(
        xb, w1.astype(jnp.bfloat16), b1.astype(jnp.bfloat16),
        w2.astype(jnp.bfloat16), b2.astype(jnp.bfloat16),
        approximate_gelu=True)
    jax.block_until_ready(out_bf16)
    assert jnp.allclose(out_bf16.astype(jnp.float32), ref, atol=5e-2, rtol=5e-2), \
        "bf16 mismatch vs reference"

    # --- Case 2: force the multi-tile path (several M tiles, chunked F) ------
    E2, F2 = 128, 256
    B2, S2 = 4, 16
    kx2, k12, k22 = jax.random.split(jax.random.PRNGKey(0), 3)
    x2 = jax.random.normal(kx2, (B2, S2, E2), jnp.float32)
    w1b, b1b = _init_linear(k12, E2, F2)
    w2b, b2b = _init_linear(k22, F2, E2)
    out2 = positionwise_ffn(x2, w1b, b1b, w2b, b2b,
                            block_m=32, block_f=128, weight_resident=False)
    jax.block_until_ready(out2)
    ref2 = _reference_ffn(x2, w1b, b1b, w2b, b2b)
    assert jnp.allclose(out2, ref2, atol=1e-3, rtol=1e-3), \
        "tiled-F mismatch vs reference"

    print("KERNEL_OK")
</pallas_src>

<mosaic_0001>
module attributes {stable_mosaic.version = 11 : i64} {
  func.func @_ffn_kernel_f32out(%arg0: i32, %arg1: i32, %arg2: memref<16x32xf32, #tpu.memory_space<vmem>>, %arg3: memref<32x64xf32, #tpu.memory_space<vmem>>, %arg4: memref<1x64xf32, #tpu.memory_space<vmem>>, %arg5: memref<64x32xf32, #tpu.memory_space<vmem>>, %arg6: memref<1x32xf32, #tpu.memory_space<vmem>>, %arg7: memref<16x32xf32, #tpu.memory_space<vmem>>) attributes {dimension_semantics = [#tpu.dimension_semantics<parallel>, #tpu.dimension_semantics<arbitrary>], iteration_bounds = array<i64: 1, 1>, scalar_prefetch = 0 : i64, scratch_operands = 0 : i64, tpu.core_type = #tpu.core_type<tc>, window_params = [{transform_indices = @transform_0, window_bounds = array<i64: 16, 32>}, {transform_indices = @transform_1, window_bounds = array<i64: 32, 64>}, {transform_indices = @transform_2, window_bounds = array<i64: 1, 64>}, {transform_indices = @transform_3, window_bounds = array<i64: 64, 32>}, {pipeline_mode = #tpu.pipeline_mode<synchronous>, transform_indices = @transform_4, window_bounds = array<i64: 1, 32>}, {transform_indices = @transform_5, window_bounds = array<i64: 16, 32>}]} {
    %c0 = arith.constant 0 : index
    %c0_0 = arith.constant 0 : index
    %0 = vector.load %arg2[%c0, %c0_0] : memref<16x32xf32, #tpu.memory_space<vmem>>, vector<16x32xf32>
    %c0_1 = arith.constant 0 : index
    %c0_2 = arith.constant 0 : index
    %1 = vector.load %arg3[%c0_1, %c0_2] : memref<32x64xf32, #tpu.memory_space<vmem>>, vector<32x64xf32>
    %cst = arith.constant dense<0.000000e+00> : vector<16x64xf32>
    %2 = tpu.matmul %0, %1, %cst {dimension_numbers = #tpu.dot_dimension_numbers<[1], [0], [0], [1], [0, 0, 1, 1], [], []>} : vector<16x32xf32>, vector<32x64xf32>, vector<16x64xf32> -> vector<16x64xf32>
    %c0_3 = arith.constant 0 : index
    %c0_4 = arith.constant 0 : index
    %3 = vector.load %arg4[%c0_3, %c0_4] : memref<1x64xf32, #tpu.memory_space<vmem>>, vector<1x64xf32>
    %4 = vector.broadcast %3 : vector<1x64xf32> to vector<16x64xf32>
    %5 = arith.addf %2, %4 : vector<16x64xf32>
    %cst_5 = arith.constant 5.000000e-01 : f32
    %6 = vector.broadcast %cst_5 : f32 to vector<16x64xf32>
    %7 = arith.mulf %6, %5 : vector<16x64xf32>
    %cst_6 = arith.constant 0.707106769 : f32
    %8 = vector.broadcast %cst_6 : f32 to vector<16x64xf32>
    %9 = arith.mulf %5, %8 : vector<16x64xf32>
    %10 = math.erf %9 : vector<16x64xf32>
    %cst_7 = arith.constant 1.000000e+00 : f32
    %11 = vector.broadcast %cst_7 : f32 to vector<16x64xf32>
    %12 = arith.addf %11, %10 : vector<16x64xf32>
    %13 = arith.mulf %7, %12 : vector<16x64xf32>
    %c0_8 = arith.constant 0 : index
    %c0_9 = arith.constant 0 : index
    %14 = vector.load %arg5[%c0_8, %c0_9] : memref<64x32xf32, #tpu.memory_space<vmem>>, vector<64x32xf32>
    %cst_10 = arith.constant dense<0.000000e+00> : vector<16x32xf32>
    %15 = tpu.matmul %13, %14, %cst_10 {dimension_numbers = #tpu.dot_dimension_numbers<[1], [0], [0], [1], [0, 0, 1, 1], [], []>} : vector<16x64xf32>, vector<64x32xf32>, vector<16x32xf32> -> vector<16x32xf32>
    %c0_i32 = arith.constant 0 : i32
    %16 = arith.cmpi eq, %arg1, %c0_i32 : i32
    %17 = arith.extui %16 : i1 to i32
    %c0_i32_11 = arith.constant 0 : i32
    %18 = arith.cmpi ne, %17, %c0_i32_11 : i32
    scf.if %18 {
      %c0_14 = arith.constant 0 : index
      %c0_15 = arith.constant 0 : index
      %22 = vector.load %arg6[%c0_14, %c0_15] : memref<1x32xf32, #tpu.memory_space<vmem>>, vector<1x32xf32>
      %23 = vector.broadcast %22 : vector<1x32xf32> to vector<16x32xf32>
      %24 = arith.addf %15, %23 : vector<16x32xf32>
      %c0_16 = arith.constant 0 : index
      %c0_17 = arith.constant 0 : index
      %25 = vector.load %arg7[%c0_16, %c0_17] : memref<16x32xf32, #tpu.memory_space<vmem>>, vector<16x32xf32>
      tpu.vector_store %arg7[%c0_16, %c0_17], %24 {strides = array<i32>} : memref<16x32xf32, #tpu.memory_space<vmem>>, vector<16x32xf32>,
    } else {
    }
    %c0_i32_12 = arith.constant 0 : i32
    %19 = arith.cmpi sgt, %arg1, %c0_i32_12 : i32
    %20 = arith.extui %19 : i1 to i32
    %c0_i32_13 = arith.constant 0 : i32
    %21 = arith.cmpi ne, %20, %c0_i32_13 : i32
    scf.if %21 {
      %c0_14 = arith.constant 0 : index
      %c0_15 = arith.constant 0 : index
      %22 = vector.load %arg7[%c0_14, %c0_15] : memref<16x32xf32, #tpu.memory_space<vmem>>, vector<16x32xf32>
      %23 = arith.addf %22, %15 : vector<16x32xf32>
      %c0_16 = arith.constant 0 : index
      %c0_17 = arith.constant 0 : index
      %24 = vector.load %arg7[%c0_16, %c0_17] : memref<16x32xf32, #tpu.memory_space<vmem>>, vector<16x32xf32>
      tpu.vector_store %arg7[%c0_16, %c0_17], %23 {strides = array<i32>} : memref<16x32xf32, #tpu.memory_space<vmem>>, vector<16x32xf32>,
    } else {
    }
    return
  }
  func.func @transform_0(%arg0: i32, %arg1: i32) -> (i32, i32) {
    %c0_i32 = arith.constant 0 : i32
    %c0_i32_0 = arith.constant 0 : i32
    return %arg0, %c0_i32 : i32, i32
  }
  func.func @transform_1(%arg0: i32, %arg1: i32) -> (i32, i32) {
    %c0_i32 = arith.constant 0 : i32
    %c0_i32_0 = arith.constant 0 : i32
    return %c0_i32, %arg1 : i32, i32
  }
  func.func @transform_2(%arg0: i32, %arg1: i32) -> (i32, i32) {
    %c0_i32 = arith.constant 0 : i32
    %c0_i32_0 = arith.constant 0 : i32
    return %c0_i32, %arg1 : i32, i32
  }
  func.func @transform_3(%arg0: i32, %arg1: i32) -> (i32, i32) {
    %c0_i32 = arith.constant 0 : i32
    %c0_i32_0 = arith.constant 0 : i32
    return %arg1, %c0_i32 : i32, i32
  }
  func.func @transform_4(%arg0: i32, %arg1: i32) -> (i32, i32) {
    %c0_i32 = arith.constant 0 : i32
    %c0_i32_0 = arith.constant 0 : i32
    %c0_i32_1 = arith.constant 0 : i32
    return %c0_i32, %c0_i32_0 : i32, i32
  }
  func.func @transform_5(%arg0: i32, %arg1: i32) -> (i32, i32) {
    %c0_i32 = arith.constant 0 : i32
    %c0_i32_0 = arith.constant 0 : i32
    return %arg0, %c0_i32 : i32, i32
  }
}

</mosaic_0001>

<llo_original>
// kernel: _ffn_pallas.1
$region0: #{_ffn_pallas.1}
  #allocation0 [shape = 'u32[]', space=smem, size = 0x4, offset = 0x4, fixed_abs, tag = 'smem constant byte address 0x4 - core index']
  #allocation1 [shape = 'u32[144,128]{1,0:T(1,128)}', space=vmem, size = 0x12000, scoped, tag = 'internal scratch']
  %s0 = inlined_call_operand.vmem [shape: f32[16,32], index: 0, kind: input, shape index: {}]
  %s1 = inlined_call_operand.vmem [shape: f32[32,64], index: 1, kind: input, shape index: {}]
  %s2 = inlined_call_operand.vmem [shape: f32[1,64], index: 2, kind: input, shape index: {}]
  %s3 = inlined_call_operand.vmem [shape: f32[64,32], index: 3, kind: input, shape index: {}]
  %s4 = inlined_call_operand.vmem [shape: f32[1,32], index: 4, kind: input, shape index: {}]
  %s5 = inlined_call_operand.hbm [shape: f32[16,32], index: 5, kind: output, shape index: {}]
  %s6 = sld [smem:[#allocation0]]
  $region38: #{_ffn_pallas.1} parent=0
    _
  %s8 = ssub.s32 1, %s6
  %s9 = scalar_select 0, %s8, %s6
  $region1: #{_ffn_pallas.1} parent=0
    #allocation2 [shape = 'u8[8192]{0}', space=vmem, size = 0x2000, scoped, tag = 'output window, operand 0, single buffered']
    #allocation3 [shape = 's32[1]{0}', space=sflag, size = 0x4, scoped, tag = 'scoped memory for _ffn_pallas.1']
    %10 = vsyncpa [#allocation3], 0
    // Predicated region
    $region2: #{_ffn_pallas.1} parent=1 // pred_check
      _
    $region3: #{_ffn_pallas.1} parent=1 // pred_check_branch
      %12 = sbr.rel (0) target = $region5
    $region4: #{_ffn_pallas.1} parent=1 // pred_region
      _
    $region5: #{_ffn_pallas.1} parent=1 // pred_fallthru
      _
    // Predicated region
    $region6: #{_ffn_pallas.1} parent=1 // pred_check
      _
    $region7: #{_ffn_pallas.1} parent=1 // pred_check_branch
      %14 = sbr.rel (0) target = $region9
    $region8: #{_ffn_pallas.1} parent=1 // pred_region
      _
    $region9: #{_ffn_pallas.1} parent=1 // pred_fallthru
      _
    // Predicated region
    $region10: #{_ffn_pallas.1} parent=1 // pred_check
      _
    $region11: #{_ffn_pallas.1} parent=1 // pred_check_branch
      %16 = sbr.rel (0) target = $region13
    $region12: #{_ffn_pallas.1} parent=1 // pred_region
      _
    $region13: #{_ffn_pallas.1} parent=1 // pred_fallthru
      _
    // Predicated region
    $region14: #{_ffn_pallas.1} parent=1 // pred_check
      _
    $region15: #{_ffn_pallas.1} parent=1 // pred_check_branch
      %18 = sbr.rel (0) target = $region17
    $region16: #{_ffn_pallas.1} parent=1 // pred_region
      _
    $region17: #{_ffn_pallas.1} parent=1 // pred_fallthru
      _
    // Predicated region
    $region18: #{_ffn_pallas.1} parent=1 // pred_check
      _
    $region19: #{_ffn_pallas.1} parent=1 // pred_check_branch
      %20 = sbr.rel (0) target = $region21
    $region20: #{_ffn_pallas.1} parent=1 // pred_region
      _
    $region21: #{_ffn_pallas.1} parent=1 // pred_fallthru
      _
    %v21 = vld [vmem:[%s0] sm:$0xff]
    %v22 = vld [vmem:[%s0 + $0x8] sm:$0xff]
    %v23 = vld [vmem:[%s1] sm:$0xff]
    %v24 = vld [vmem:[%s1 + $0x8] sm:$0xff]
    %v25 = vld [vmem:[%s1 + $0x10] sm:$0xff]
    %v26 = vld [vmem:[%s1 + $0x18] sm:$0xff]
    %v27 = vld [vmem:[%s2] sm:$0x1]
    %v29 = vlaneseq
    %v30 = vshrl.u32 %v29, 7
    %v31 = vsub.s32 0, %v30
    %v32 = vrot.slane %v27, %v31
    %vm34 = vcmask 261120
    %v36 = vsel %vm34, %v21, 0
    %v39 = vsel %vm34, %v22, 0
    %41 = vmatprep.subr.mxu0 0.0
    %42 = vmatpush1.msra.mxu0 %v23
    %43 = vmatprep.subr.mxu0 0.0
    %44 = vmatpush1.msra.mxu0 %v24
    %45 = vmatprep.subr.mxu0 0.0
    %46 = vmatpush1.msra.mxu0 %v25
    %47 = vmatprep.subr.mxu0 0.0
    %48 = vmatpush1.msra.mxu0 %v26
    %49 = vmatprep.subr.mxu0 0.0
    %50 = vmatpush1.msra.mxu0 0.0
    %51 = vmatprep.subr.mxu0 0.0
    %52 = vmatpush1.msra.mxu0 0.0
    %53 = vmatprep.subr.mxu0 0.0
    %54 = vmatpush1.msra.mxu0 0.0
    %55 = vmatprep.subr.mxu0 0.0
    %56 = vmatpush1.msra.mxu0 0.0
    %57 = vmatprep.subr.mxu0 0.0
    %58 = vmatpush1.msra.mxu0 0.0
    %59 = vmatprep.subr.mxu0 0.0
    %60 = vmatpush1.msra.mxu0 0.0
    %61 = vmatprep.subr.mxu0 0.0
    %62 = vmatpush1.msra.mxu0 0.0
    %63 = vmatprep.subr.mxu0 0.0
    %64 = vmatpush1.msra.mxu0 0.0
    %65 = vmatprep.subr.mxu0 0.0
    %66 = vmatpush1.msra.mxu0 0.0
    %67 = vmatprep.subr.mxu0 0.0
    %68 = vmatpush1.msra.mxu0 0.0
    %69 = vmatprep.subr.mxu0 0.0
    %70 = vmatpush1.msra.mxu0 0.0
    %71 = vmatprep.subr.mxu0 0.0
    %72 = vmatpush1.msra.mxu0 0.0
    %73 = vmatprep.subr.mxu0 0.0
    %74 = vmatpush1.msra.mxu0 0.0
    %75 = vmatprep.subr.mxu0 0.0
    %76 = vmatpush1.msra.mxu0 0.0
    %77 = vmatprep.subr.mxu0 0.0
    %78 = vmatpush1.msra.mxu0 0.0
    %79 = vmatprep.subr.mxu0 0.0
    %80 = vmatpush1.msra.mxu0 0.0
    %81 = vmatprep.subr.mxu0 0.0
    %82 = vmatpush1.msra.mxu0 0.0
    %83 = vmatprep.subr.mxu0 0.0
    %84 = vmatpush1.msra.mxu0 0.0
    %85 = vmatprep.subr.mxu0 0.0
    %86 = vmatpush1.msra.mxu0 0.0
    %87 = vmatprep.subr.mxu0 0.0
    %88 = vmatpush1.msra.mxu0 0.0
    %89 = vmatprep.subr.mxu0 0.0
    %90 = vmatpush1.msra.mxu0 0.0
    %91 = vmatprep.subr.mxu0 0.0
    %92 = vmatpush1.msra.mxu0 0.0
    %93 = vmatprep.subr.mxu0 0.0
    %94 = vmatpush1.msra.mxu0 0.0
    %95 = vmatprep.subr.mxu0 0.0
    %96 = vmatpush1.msra.mxu0 0.0
    %97 = vmatprep.subr.mxu0 0.0
    %98 = vmatpush1.msra.mxu0 0.0
    %99 = vmatprep.subr.mxu0 0.0
    %100 = vmatpush1.msra.mxu0 0.0
    %101 = vmatprep.subr.mxu0 0.0
    %102 = vmatpush1.msra.mxu0 0.0
    %103 = vmatprep.subr.mxu0 0.0
    %104 = vmatpush1.msra.mxu0 0.0
    %105 = vmatprep.mubr.f32.mxu0 0.0
    %106 = vmatmul.mubr.f32.gmra.mrb[0].mxu0 %v36
    %v107 = vpop.f32.mrb[0].mxu0
    %v108 = vadd.f32 %v32, %v107
    %v109 = vpop.f32.mrb[0].mxu0
    %110 = vmatprep.mubr.f32.mxu0 0.0
    %111 = vmatmul.mubr.f32.gmra.mrb[0].mxu0 %v39
    %v112 = vpop.f32.mrb[0].mxu0
    %v113 = vadd.f32 %v32, %v112
    %v114 = vpop.f32.mrb[0].mxu0
    %115 = vdwg.mxu0
    %v116 = vmul.f32 %v108, 0.5
    %v117 = vmul.f32 %v113, 0.5
    %v118 = vmul.f32 %v108, 0.70710677
    %v119 = vmul.f32 %v113, 0.70710677
    %v120 = verf.f32.pop %v118
    %v121 = verf.f32.pop %v119
    %v122 = vadd.f32 %v120, 1.0
    %v123 = vadd.f32 %v121, 1.0
    %v124 = vmul.f32 %v116, %v122
    %v125 = vmul.f32 %v117, %v123
    %v126 = vld [vmem:[%s3] sm:$0xff]
    %v127 = vld [vmem:[%s3 + $0x8] sm:$0xff]
    %v128 = vld [vmem:[%s3 + $0x10] sm:$0xff]
    %v129 = vld [vmem:[%s3 + $0x18] sm:$0xff]
    %v130 = vld [vmem:[%s3 + $0x20] sm:$0xff]
    %v131 = vld [vmem:[%s3 + $0x28] sm:$0xff]
    %v132 = vld [vmem:[%s3 + $0x30] sm:$0xff]
    %v133 = vld [vmem:[%s3 + $0x38] sm:$0xff]
    %vm134 = vcmask 523264
    %v136 = vsel %vm134, %v124, 0
    %v139 = vsel %vm134, %v125, 0
    %141 = vmatprep.subr.mxu0 0.0
    %142 = vmatpush1.msra.mxu0 %v126
    %143 = vmatprep.subr.mxu0 0.0
    %144 = vmatpush1.msra.mxu0 %v127
    %145 = vmatprep.subr.mxu0 0.0
    %146 = vmatpush1.msra.mxu0 %v128
    %147 = vmatprep.subr.mxu0 0.0
    %148 = vmatpush1.msra.mxu0 %v129
    %149 = vmatprep.subr.mxu0 0.0
    %150 = vmatpush1.msra.mxu0 %v130
    %151 = vmatprep.subr.mxu0 0.0
    %152 = vmatpush1.msra.mxu0 %v131
    %153 = vmatprep.subr.mxu0 0.0
    %154 = vmatpush1.msra.mxu0 %v132
    %155 = vmatprep.subr.mxu0 0.0
    %156 = vmatpush1.msra.mxu0 %v133
    %157 = vmatprep.subr.mxu0 0.0
    %158 = vmatpush1.msra.mxu0 0.0
    %159 = vmatprep.subr.mxu0 0.0
    %160 = vmatpush1.msra.mxu0 0.0
    %161 = vmatprep.subr.mxu0 0.0
    %162 = vmatpush1.msra.mxu0 0.0
    %163 = vmatprep.subr.mxu0 0.0
    %164 = vmatpush1.msra.mxu0 0.0
    %165 = vmatprep.subr.mxu0 0.0
    %166 = vmatpush1.msra.mxu0 0.0
    %167 = vmatprep.subr.mxu0 0.0
    %168 = vmatpush1.msra.mxu0 0.0
    %169 = vmatprep.subr.mxu0 0.0
    %170 = vmatpush1.msra.mxu0 0.0
    %171 = vmatprep.subr.mxu0 0.0
    %172 = vmatpush1.msra.mxu0 0.0
    %173 = vmatprep.subr.mxu0 0.0
    %174 = vmatpush1.msra.mxu0 0.0
    %175 = vmatprep.subr.mxu0 0.0
    %176 = vmatpush1.msra.mxu0 0.0
    %177 = vmatprep.subr.mxu0 0.0
    %178 = vmatpush1.msra.mxu0 0.0
    %179 = vmatprep.subr.mxu0 0.0
    %180 = vmatpush1.msra.mxu0 0.0
    %181 = vmatprep.subr.mxu0 0.0
    %182 = vmatpush1.msra.mxu0 0.0
    %183 = vmatprep.subr.mxu0 0.0
    %184 = vmatpush1.msra.mxu0 0.0
    %185 = vmatprep.subr.mxu0 0.0
    %186 = vmatpush1.msra.mxu0 0.0
    %187 = vmatprep.subr.mxu0 0.0
    %188 = vmatpush1.msra.mxu0 0.0
    %189 = vmatprep.subr.mxu0 0.0
    %190 = vmatpush1.msra.mxu0 0.0
    %191 = vmatprep.subr.mxu0 0.0
    %192 = vmatpush1.msra.mxu0 0.0
    %193 = vmatprep.subr.mxu0 0.0
    %194 = vmatpush1.msra.mxu0 0.0
    %195 = vmatprep.subr.mxu0 0.0
    %196 = vmatpush1.msra.mxu0 0.0
    %197 = vmatprep.subr.mxu0 0.0
    %198 = vmatpush1.msra.mxu0 0.0
    %199 = vmatprep.subr.mxu0 0.0
    %200 = vmatpush1.msra.mxu0 0.0
    %201 = vmatprep.subr.mxu0 0.0
    %202 = vmatpush1.msra.mxu0 0.0
    %203 = vmatprep.subr.mxu0 0.0
    %204 = vmatpush1.msra.mxu0 0.0
    %205 = vmatprep.mubr.f32.mxu0 0.0
    %206 = vmatmul.mubr.f32.gmra.mrb[0].mxu0 %v136
    %v207 = vpop.f32.mrb[0].mxu0
    %v208 = vadd.f32 0.0, %v207
    %v209 = vpop.f32.mrb[0].mxu0
    %210 = vmatprep.mubr.f32.mxu0 0.0
    %211 = vmatmul.mubr.f32.gmra.mrb[0].mxu0 %v139
    %v212 = vpop.f32.mrb[0].mxu0
    %v213 = vadd.f32 0.0, %v212
    %v214 = vpop.f32.mrb[0].mxu0
    %215 = vdwg.mxu0
    %p216 = scmp.eq.s32.totalorder 0, 0
    // Predicated region
    $region22: #{_ffn_pallas.1} parent=1 // pred_check
      %p217 = pneg %p216
    $region23: #{_ffn_pallas.1} parent=1 // pred_check_branch
      %219 = sbr.rel (%p217) target = $region25
    $region24: #{_ffn_pallas.1} parent=1 // pred_region
      %v220 = vld [vmem:[%s4] sm:$0x1]
      %v222 = vlaneseq
      %v223 = vshrl.u32 %v222, 7
      %v224 = vsub.s32 0, %v223
      %v225 = vrot.slane %v220, %v224
      %v227 = vadd.f32 %v208, %v225
      %v228 = vadd.f32 %v213, %v225
      %229 = vst.msk [vmem:[#allocation2] sm:$0xff] %vm34, %v227
      %230 = vst.msk [vmem:[#allocation2 + $0x8] sm:$0xff] %vm34, %v228
    $region25: #{_ffn_pallas.1} parent=1 // pred_fallthru
      _
    %p231 = scmp.gt.s32.totalorder 0, 0
    // Predicated region
    $region26: #{_ffn_pallas.1} parent=1 // pred_check
      %p232 = pneg %p231
    $region27: #{_ffn_pallas.1} parent=1 // pred_check_branch
      %234 = sbr.rel (%p232) target = $region29
    $region28: #{_ffn_pallas.1} parent=1 // pred_region
      %v235 = vld [vmem:[#allocation2] sm:$0xff]
      %v236 = vld [vmem:[#allocation2 + $0x8] sm:$0xff]
      %v237 = vadd.f32 %v235, %v208
      %v238 = vadd.f32 %v236, %v213
      %239 = vst.msk [vmem:[#allocation2] sm:$0xff] %vm34, %v237
      %240 = vst.msk [vmem:[#allocation2 + $0x8] sm:$0xff] %vm34, %v238
    $region29: #{_ffn_pallas.1} parent=1 // pred_fallthru
      _
    // Predicated region
    $region30: #{_ffn_pallas.1} parent=1 // pred_check
      _
    $region31: #{_ffn_pallas.1} parent=1 // pred_check_branch
      %242 = sbr.rel (0) target = $region33
    $region32: #{_ffn_pallas.1} parent=1 // pred_region
      %s244 = ssub.s32 256, 256
      %245 = vsyncadd [#allocation3], %s244
      %s246 = sshll.u32 [#allocation2], 4
      %s247 = int_to_ptr.vmem [resolvable:$true] %s246
      %252 = dma.vmem_to_hbm [thread:$0]  %s247, 256, %s5, [#allocation3], 128, 128, 8
    $region33: #{_ffn_pallas.1} parent=1 // pred_fallthru
      _
    // Predicated region
    $region34: #{_ffn_pallas.1} parent=1 // pred_check
      _
    $region35: #{_ffn_pallas.1} parent=1 // pred_check_branch
      %254 = sbr.rel (0) target = $region37
    $region36: #{_ffn_pallas.1} parent=1 // pred_region
      %255 = dma.done [#allocation3], 256
    $region37: #{_ffn_pallas.1} parent=1 // pred_fallthru
      _
    %256 = vsyncpa [#allocation3], 1

</llo_original>
